<compile_context>
chip_gen: v6e
topology: v6e:2x2x1
jax: 0.10.0
libtpu: 0.0.40
codegen_flags: <defaults>
</compile_context>

<pallas_src>
import functools

import jax
import jax.numpy as jnp
from jax.experimental import pallas as pl
from jax.experimental.pallas import tpu as pltpu


def _rmsnorm_kernel(x_ref, w_ref, o_ref, *, eps):
    # x_ref: (tile_rows, dim), w_ref: (1, dim), o_ref: (tile_rows, dim)
    x = x_ref[...].astype(jnp.float32)
    ms = jnp.mean(x * x, axis=-1, keepdims=True)          # XLU reduce, (rows, 1)
    normed = x * jax.lax.rsqrt(ms + eps)                   # EUP rsqrt, f32
    # Match PyTorch: cast normed back to the input dtype, then scale by weight
    # (result promotes to promote(x.dtype, weight.dtype) == o_ref.dtype).
    normed = normed.astype(x_ref.dtype)
    o_ref[...] = (normed * w_ref[...]).astype(o_ref.dtype)


def _round_up(x, m):
    return ((x + m - 1) // m) * m


def _round_down_min(x, m):
    return max(m, (x // m) * m)


def rmsnorm(x, weight, eps=1e-6, *, tile_rows=None):
    """RMSNorm over the last axis of `x`, scaled by `weight` (shape [dim])."""
    orig_shape = x.shape
    dim = orig_shape[-1]
    rows = 1
    for s in orig_shape[:-1]:
        rows *= s

    # PyTorch: normed.type_as(x) * weight  -> promotes (e.g. bf16 x, f32 w -> f32 out).
    out_dtype = jnp.promote_types(x.dtype, weight.dtype)

    x2d = x.reshape(rows, dim)
    w2d = weight.reshape(1, dim)

    x_itemsize = jnp.dtype(x.dtype).itemsize
    o_itemsize = jnp.dtype(out_dtype).itemsize
    # Sublane packing of the row axis: 8 rows for 32-bit, 16 for bf16, 32 for 8-bit.
    pack = max(8, 256 // (x_itemsize * 8))

    # Per-core VMEM capacity: 128 MiB (v5e/v6e) or 64 MiB (v7x). Conservative fallback.
    try:
        vmem_cap = int(pltpu.get_tpu_info().vmem_capacity_bytes)
    except Exception:
        vmem_cap = 64 * 1024 * 1024

    if tile_rows is None:
        # Target a few MiB of input per block, sized so that double-buffered
        # in/out tiles plus the f32 upcast temporaries fit comfortably in VMEM.
        # (e.g. f32 dim=4096 -> 512 rows on v7x, up to ~8 MiB blocks on v6e.)
        target_block_bytes = min(8 * 1024 * 1024, vmem_cap // 12)
        tile_rows = max(pack, target_block_bytes // (dim * x_itemsize))

    tile_rows = _round_down_min(int(tile_rows), pack)
    # Never use a tile meaningfully larger than the row count itself.
    tile_rows = min(tile_rows, _round_up(rows, pack))
    # Prefer >= 2 grid steps so the "parallel" axis can shard across TensorCores.
    if rows > pack and pl.cdiv(rows, tile_rows) < 2:
        tile_rows = max(pack, _round_up(pl.cdiv(rows, 2), pack))

    num_blocks = pl.cdiv(rows, tile_rows)  # partial last block is masked by Pallas

    # Rough VMEM budget: double-buffered input + output tiles, f32 temporaries,
    # replicated weight tile; clamp to a sane window within physical capacity.
    block_in = tile_rows * dim * x_itemsize
    block_out = tile_rows * dim * o_itemsize
    f32_tmp = 2 * tile_rows * dim * 4
    vmem_need = 2 * (block_in + block_out) + f32_tmp + 2 * dim * 4
    vmem_limit = int(min(max(vmem_need + (8 << 20), 32 << 20), int(0.8 * vmem_cap)))
    vmem_limit = max(vmem_limit, vmem_need + (2 << 20))

    kernel = functools.partial(_rmsnorm_kernel, eps=eps)

    out2d = pl.pallas_call(
        kernel,
        out_shape=jax.ShapeDtypeStruct((rows, dim), out_dtype),
        grid_spec=pltpu.PrefetchScalarGridSpec(
            num_scalar_prefetch=0,
            grid=(num_blocks,),
            in_specs=[
                pl.BlockSpec((tile_rows, dim), lambda i: (i, 0)),
                pl.BlockSpec((1, dim), lambda i: (0, 0)),
            ],
            out_specs=pl.BlockSpec((tile_rows, dim), lambda i: (i, 0)),
        ),
        compiler_params=pltpu.CompilerParams(
            dimension_semantics=("parallel",),
            vmem_limit_bytes=vmem_limit,
        ),
    )(x2d, w2d)

    return out2d.reshape(orig_shape[:-1] + (dim,))


def rmsnorm_ref(x, weight, eps=1e-6):
    xf = x.astype(jnp.float32)
    normed = xf * jax.lax.rsqrt(jnp.mean(xf * xf, axis=-1, keepdims=True) + eps)
    return normed.astype(x.dtype) * weight


if __name__ == "__main__":
    key = jax.random.PRNGKey(0)
    batch, seq, dim = 2, 8, 32

    x = jax.random.normal(key, (batch, seq, dim), dtype=jnp.float32)
    # Deterministic parameter init (matches nn.Parameter(torch.ones(dim))).
    weight = jnp.ones((dim,), dtype=jnp.float32)

    out = rmsnorm(x, weight, eps=1e-6)
    out = jax.block_until_ready(out)

    ref = rmsnorm_ref(x, weight, eps=1e-6)
    assert out.shape == x.shape
    assert out.dtype == jnp.promote_types(x.dtype, weight.dtype)
    assert jnp.allclose(out, ref, atol=1e-5, rtol=1e-5)

    print("KERNEL_OK")
</pallas_src>

<mosaic_0001>
module attributes {stable_mosaic.version = 11 : i64} {
  func.func @_rmsnorm_kernel(%arg0: i32, %arg1: memref<8x32xf32, #tpu.memory_space<vmem>>, %arg2: memref<1x32xf32, #tpu.memory_space<vmem>>, %arg3: memref<8x32xf32, #tpu.memory_space<vmem>>) attributes {dimension_semantics = [#tpu.dimension_semantics<parallel>], iteration_bounds = array<i64: 2>, scalar_prefetch = 0 : i64, scratch_operands = 0 : i64, tpu.core_type = #tpu.core_type<tc>, window_params = [{transform_indices = @transform_0, window_bounds = array<i64: 8, 32>}, {pipeline_mode = #tpu.pipeline_mode<synchronous>, transform_indices = @transform_1, window_bounds = array<i64: 1, 32>}, {transform_indices = @transform_2, window_bounds = array<i64: 8, 32>}]} {
    %c0 = arith.constant 0 : index
    %c0_0 = arith.constant 0 : index
    %0 = vector.load %arg1[%c0, %c0_0] : memref<8x32xf32, #tpu.memory_space<vmem>>, vector<8x32xf32>
    %1 = arith.mulf %0, %0 : vector<8x32xf32>
    %cst = arith.constant dense<0.000000e+00> : vector<8xf32>
    %2 = vector.multi_reduction <add>, %1, %cst [1] : vector<8x32xf32> to vector<8xf32>
    %3 = vector.shape_cast %2 : vector<8xf32> to vector<8x1xf32>
    %cst_1 = arith.constant 3.200000e+01 : f32
    %4 = vector.broadcast %cst_1 : f32 to vector<8x1xf32>
    %5 = arith.divf %3, %4 : vector<8x1xf32>
    %cst_2 = arith.constant 9.99999997E-7 : f32
    %6 = vector.broadcast %cst_2 : f32 to vector<8x1xf32>
    %7 = arith.addf %5, %6 : vector<8x1xf32>
    %8 = math.rsqrt %7 : vector<8x1xf32>
    %9 = vector.broadcast %8 : vector<8x1xf32> to vector<8x32xf32>
    %10 = arith.mulf %0, %9 : vector<8x32xf32>
    %c0_3 = arith.constant 0 : index
    %c0_4 = arith.constant 0 : index
    %11 = vector.load %arg2[%c0_3, %c0_4] : memref<1x32xf32, #tpu.memory_space<vmem>>, vector<1x32xf32>
    %12 = vector.broadcast %11 : vector<1x32xf32> to vector<8x32xf32>
    %13 = arith.mulf %10, %12 : vector<8x32xf32>
    %c0_5 = arith.constant 0 : index
    %c0_6 = arith.constant 0 : index
    %14 = vector.load %arg3[%c0_5, %c0_6] : memref<8x32xf32, #tpu.memory_space<vmem>>, vector<8x32xf32>
    tpu.vector_store %arg3[%c0_5, %c0_6], %13 {strides = array<i32>} : memref<8x32xf32, #tpu.memory_space<vmem>>, vector<8x32xf32>,
    return
  }
  func.func @transform_0(%arg0: i32) -> (i32, i32) {
    %c0_i32 = arith.constant 0 : i32
    %c0_i32_0 = arith.constant 0 : i32
    return %arg0, %c0_i32 : i32, i32
  }
  func.func @transform_1(%arg0: i32) -> (i32, i32) {
    %c0_i32 = arith.constant 0 : i32
    %c0_i32_0 = arith.constant 0 : i32
    %c0_i32_1 = arith.constant 0 : i32
    return %c0_i32, %c0_i32_0 : i32, i32
  }
  func.func @transform_2(%arg0: i32) -> (i32, i32) {
    %c0_i32 = arith.constant 0 : i32
    %c0_i32_0 = arith.constant 0 : i32
    return %arg0, %c0_i32 : i32, i32
  }
}

</mosaic_0001>

<llo_original>
// kernel: tpu_custom_call.1
$region0: #{tpu_custom_call.1}
  #allocation0 [shape = 'u32[]', space=smem, size = 0x4, offset = 0x4, fixed_abs, tag = 'smem constant byte address 0x4 - core index']
  #allocation1 [shape = 'u32[144,128]{1,0:T(1,128)}', space=vmem, size = 0x12000, scoped, tag = 'internal scratch']
  %s0 = inlined_call_operand.hbm [shape: f32[16,32], index: 0, kind: input, shape index: {}]
  %s1 = inlined_call_operand.vmem [shape: f32[1,32], index: 1, kind: input, shape index: {}]
  %s2 = inlined_call_operand.hbm [shape: f32[16,32], index: 2, kind: output, shape index: {}]
  %s3 = sld [smem:[#allocation0]]
  $region45: #{tpu_custom_call.1} parent=0
    _
  %s5 = ssub.s32 1, %s3
  %s6 = scalar_select 0, %s5, %s3
  $region1: #{tpu_custom_call.1} parent=0
    #allocation2 [shape = 'u8[8192]{0}', space=vmem, size = 0x2000, scoped, tag = 'input window, operand 0']
    #allocation3 [shape = 's32[2]{0}', space=sflag, size = 0x8, scoped, tag = 'scoped memory for tpu_custom_call.1']
    #allocation4 [shape = 's32[2]{0}', space=sflag, size = 0x8, scoped, tag = 'scoped memory for tpu_custom_call.1']
    #allocation5 [shape = 'u8[8192]{0}', space=vmem, size = 0x2000, scoped, tag = 'output window, operand 0']
    %7 = vsyncpa [#allocation3], 0
    %s8 = scalar_lea.sflag [#allocation3], 1
    %9 = vsyncpa %s8, 0
    %10 = vsyncpa [#allocation4], 0
    %s11 = scalar_lea.sflag [#allocation4], 1
    %12 = vsyncpa %s11, 0
    loop: start=0, step=1, limit=4
    $region2: #{tpu_custom_call.1} parent=1 // loop_pre_header
      _
    $region3: #{tpu_custom_call.1} parent=1 // loop_header
      %s14 = sphi 0, %s18
      %p15 = scmp.ge.s32.totalorder %s14, 4
      %s24 = sphi 0, %s26
      %s27 = sphi 0, %s24
      %s28 = sphi 0, %s27
      %s44 = sphi 0, %s28
      %s48 = sphi 0, %s48
      %s50 = sphi 0, %s48
      %s51 = sphi 0, %s50
      %s65 = sphi 0, %s51
      %s71 = sphi 0, %s73
      %s74 = sphi 0, %s71
      %s75 = sphi 0, %s74
      %s91 = sphi 0, %s75
    $region4: #{tpu_custom_call.1} parent=1 // loop_header_branch
      %17 = sbr.rel (%p15) target = $region8
    $region5: #{tpu_custom_call.1} parent=1 // loop_body
      %s19 = ssub.s32 %s14, 1
      %s20 = ssub.s32 %s14, 2
      %s21 = sadd.s32 %s14, 1
      %s22 = ssub.s32 %s14, %s21
      %p23 = scmp.eq.s32.totalorder %s22, 0
      %s25 = sadd.s32 %s24, 1
      %s26 = scalar_select %p23, %s24, %s25
      %p29 = pneg %p23
      %p30 = scmp.eq.s32.totalorder %s14, 1
      %p31 = por %p29, %p30
      %p32 = scmp.ne.s32.totalorder %s24, %s27
      %p33 = scmp.eq.s32.totalorder %s14, 0
      %p34 = por %p32, %p33
      %p35 = scmp.ne.s32.totalorder %s24, %s27
      %p36 = scmp.eq.s32.totalorder %s19, 1
      %p37 = por %p35, %p36
      %p38 = scmp.ne.s32.totalorder %s27, %s28
      %p39 = scmp.eq.s32.totalorder %s19, 0
      %p40 = por %p38, %p39
      %p41 = scmp.ne.s32.totalorder %s27, %s28
      %p42 = scmp.eq.s32.totalorder %s20, 1
      %p43 = por %p41, %p42
      %p45 = scmp.ne.s32.totalorder %s28, %s44
      %p46 = scmp.eq.s32.totalorder %s20, 0
      %p47 = por %p45, %p46
      %s49 = sadd.s32 %s48, 1
      %p52 = scmp.eq.s32.totalorder %s14, 1
      %p53 = scmp.ne.s32.totalorder %s48, %s50
      %p54 = scmp.eq.s32.totalorder %s14, 0
      %p55 = por %p53, %p54
      %p56 = scmp.ne.s32.totalorder %s48, %s50
      %p57 = scmp.eq.s32.totalorder %s19, 1
      %p58 = por %p56, %p57
      %p59 = scmp.ne.s32.totalorder %s50, %s51
      %p60 = scmp.eq.s32.totalorder %s19, 0
      %p61 = por %p59, %p60
      %p62 = scmp.ne.s32.totalorder %s50, %s51
      %p63 = scmp.eq.s32.totalorder %s20, 1
      %p64 = por %p62, %p63
      %p66 = scmp.ne.s32.totalorder %s51, %s65
      %p67 = scmp.eq.s32.totalorder %s20, 0
      %p68 = por %p66, %p67
      %s69 = ssub.s32 %s14, %s21
      %p70 = scmp.eq.s32.totalorder %s69, 0
      %s72 = sadd.s32 %s71, 1
      %s73 = scalar_select %p70, %s71, %s72
      %p76 = pneg %p70
      %p77 = scmp.eq.s32.totalorder %s14, 1
      %p78 = por %p76, %p77
      %p79 = scmp.ne.s32.totalorder %s71, %s74
      %p80 = scmp.eq.s32.totalorder %s14, 0
      %p81 = por %p79, %p80
      %p82 = scmp.ne.s32.totalorder %s71, %s74
      %p83 = scmp.eq.s32.totalorder %s19, 1
      %p84 = por %p82, %p83
      %p85 = scmp.ne.s32.totalorder %s74, %s75
      %p86 = scmp.eq.s32.totalorder %s19, 0
      %p87 = por %p85, %p86
      %p88 = scmp.ne.s32.totalorder %s74, %s75
      %p89 = scmp.eq.s32.totalorder %s20, 1
      %p90 = por %p88, %p89
      %p92 = scmp.ne.s32.totalorder %s75, %s91
      %p93 = scmp.eq.s32.totalorder %s20, 0
      %p94 = por %p92, %p93
      %p95 = scmp.le.s32.totalorder 1, %s14
      %p96 = scmp.lt.s32.totalorder %s14, 3
      %p97 = pnand %p95, %p96
      %p98 = pneg %p97
      // Predicated region
      $region9: #{tpu_custom_call.1} parent=5 // pred_check
        _
      $region10: #{tpu_custom_call.1} parent=5 // pred_check_branch
        %100 = sbr.rel (%p97) target = $region12
      $region11: #{tpu_custom_call.1} parent=5 // pred_region
        %s101 = ssub.s32 %s14, 1
        // Predicated region
        $region13: #{tpu_custom_call.1} parent=11 // pred_check
          %p102 = pneg %p61
        $region14: #{tpu_custom_call.1} parent=11 // pred_check_branch
          %104 = sbr.rel (%p102) target = $region16
        $region15: #{tpu_custom_call.1} parent=11 // pred_region
          _
        $region16: #{tpu_custom_call.1} parent=11 // pred_fallthru
          _
      $region12: #{tpu_custom_call.1} parent=5 // pred_fallthru
        _
      %p105 = scmp.lt.s32.totalorder %s14, 2
      // Predicated region
      $region17: #{tpu_custom_call.1} parent=5 // pred_check
        %p106 = pneg %p105
      $region18: #{tpu_custom_call.1} parent=5 // pred_check_branch
        %108 = sbr.rel (%p106) target = $region20
      $region19: #{tpu_custom_call.1} parent=5 // pred_region
        // Predicated region
        $region21: #{tpu_custom_call.1} parent=19 // pred_check
          %p109 = pneg %p34
        $region22: #{tpu_custom_call.1} parent=19 // pred_check_branch
          %111 = sbr.rel (%p109) target = $region24
        $region23: #{tpu_custom_call.1} parent=19 // pred_region
          %s112 = sand.u32 %s24, 1
          %s113 = scalar_lea.sflag [#allocation3], %s112
          %s114 = sand.u32 %s24, 1
          %s115 = smul.addr %s114, 8
          %s116 = scalar_lea.vmem [#allocation2], %s115
          %s118 = ssub.s32 128, 128
          %119 = vsyncadd %s113, %s118
          %s120 = smul.addr %s14, 128
          %s121 = scalar_lea.hbm %s0, %s120
          %s123 = sshll.u32 %s116, 4
          %s124 = int_to_ptr.vmem [resolvable:$true] %s123
          %126 = dma.hbm_to_vmem [thread:$0]  %s121, 128, %s124, %s113
        $region24: #{tpu_custom_call.1} parent=19 // pred_fallthru
          _
      $region20: #{tpu_custom_call.1} parent=5 // pred_fallthru
        _
      %p127 = scmp.le.s32.totalorder 1, %s14
      %p128 = scmp.lt.s32.totalorder %s14, 3
      %p129 = pnand %p127, %p128
      %p130 = pneg %p129
      // Predicated region
      $region25: #{tpu_custom_call.1} parent=5 // pred_check
        _
      $region26: #{tpu_custom_call.1} parent=5 // pred_check_branch
        %132 = sbr.rel (%p129) target = $region28
      $region27: #{tpu_custom_call.1} parent=5 // pred_region
        %s133 = ssub.s32 %s14, 1
        %s134 = sand.u32 %s27, 1
        %s135 = scalar_lea.sflag [#allocation3], %s134
        %s136 = sand.u32 %s27, 1
        %s137 = smul.addr %s136, 8
        %s138 = scalar_lea.vmem [#allocation2], %s137
        // Predicated region
        $region29: #{tpu_custom_call.1} parent=27 // pred_check
          %p139 = pneg %p40
        $region30: #{tpu_custom_call.1} parent=27 // pred_check_branch
          %141 = sbr.rel (%p139) target = $region32
        $region31: #{tpu_custom_call.1} parent=27 // pred_region
          %142 = dma.done %s135, 128
        $region32: #{tpu_custom_call.1} parent=27 // pred_fallthru
          _
        %s143 = sand.u32 %s27, 1
        %s144 = scalar_lea.sflag [#allocation3], %s143
        %s145 = sand.u32 %s27, 1
        %s146 = smul.addr %s145, 8
        %s147 = scalar_lea.vmem [#allocation2], %s146
        %p148 = pneg %p40
        %p149 = pneg %p37
        %p150 = pneg %p61
        %p151 = pneg %p58
        %p152 = pneg %p87
        %p153 = pneg %p84
        %s154 = sand.u32 %s74, 1
        %s155 = scalar_lea.sflag [#allocation4], %s154
        %s156 = sand.u32 %s74, 1
        %s157 = smul.addr %s156, 8
        %s158 = scalar_lea.vmem [#allocation5], %s157
        %v159 = vld [vmem:[%s138] sm:$0xff]
        %v160 = vmul.f32 %v159, %v159
        %vm161 = vcmask 261120
        %v162 = vsel %vm161, %v160, 0.0
        %163 = vadd.xlane.f32.xlu0 %v162
        %v164 = vpop.xlane.xlu0 %163
        %v165 = vrcp.pop 32.0
        %v166 = vmul.f32 %v164, %v165
        %v167 = vadd.f32 %v166, 1e-06
        %v168 = vrsqrt.pop %v167
        %v169 = vmul.f32 %v159, %v168
        %v170 = vld [vmem:[%s1] sm:$0x1]
        %v172 = vlaneseq
        %v173 = vshrl.u32 %v172, 7
        %v174 = vsub.s32 0, %v173
        %v175 = vrot.slane %v170, %v174
        %v177 = vmul.f32 %v169, %v175
        %178 = vst.msk [vmem:[%s158] sm:$0xff] %vm161, %v177
        %s179 = sand.u32 %s74, 1
        %s180 = scalar_lea.sflag [#allocation4], %s179
        %s181 = sand.u32 %s74, 1
        %s182 = smul.addr %s181, 8
        %s183 = scalar_lea.vmem [#allocation5], %s182
        // Predicated region
        $region33: #{tpu_custom_call.1} parent=27 // pred_check
          %p184 = pneg %p84
        $region34: #{tpu_custom_call.1} parent=27 // pred_check_branch
          %186 = sbr.rel (%p184) target = $region36
        $region35: #{tpu_custom_call.1} parent=27 // pred_region
          %s188 = ssub.s32 128, 128
          %189 = vsyncadd %s180, %s188
          %s190 = smul.addr %s19, 128
          %s191 = scalar_lea.hbm %s2, %s190
          %s193 = sshll.u32 %s183, 4
          %s194 = int_to_ptr.vmem [resolvable:$true] %s193
          %196 = dma.vmem_to_hbm [thread:$0]  %s194, 128, %s191, %s180
        $region36: #{tpu_custom_call.1} parent=27 // pred_fallthru
          _
      $region28: #{tpu_custom_call.1} parent=5 // pred_fallthru
        _
      %p197 = scmp.le.s32.totalorder 2, %s14
      // Predicated region
      $region37: #{tpu_custom_call.1} parent=5 // pred_check
        %p198 = pneg %p197
      $region38: #{tpu_custom_call.1} parent=5 // pred_check_branch
        %200 = sbr.rel (%p198) target = $region40
      $region39: #{tpu_custom_call.1} parent=5 // pred_region
        %s201 = ssub.s32 %s14, 2
        // Predicated region
        $region41: #{tpu_custom_call.1} parent=39 // pred_check
          %p202 = pneg %p90
        $region42: #{tpu_custom_call.1} parent=39 // pred_check_branch
          %204 = sbr.rel (%p202) target = $region44
        $region43: #{tpu_custom_call.1} parent=39 // pred_region
          %s205 = sand.u32 %s75, 1
          %s206 = scalar_lea.sflag [#allocation4], %s205
          %s207 = sand.u32 %s75, 1
          %s208 = smul.addr %s207, 8
          %s209 = scalar_lea.vmem [#allocation5], %s208
          %210 = dma.done %s206, 128
        $region44: #{tpu_custom_call.1} parent=39 // pred_fallthru
          _
      $region40: #{tpu_custom_call.1} parent=5 // pred_fallthru
        _
    $region6: #{tpu_custom_call.1} parent=1 // loop_footer
      %s18 = sadd.s32 1, %s14
    $region7: #{tpu_custom_call.1} parent=1 // loop_footer_branch
      %13 = sbr.rel target = $region3
    $region8: #{tpu_custom_call.1} parent=1 // loop_exit
      _
    %211 = vsyncpa [#allocation3], 1
    %s212 = scalar_lea.sflag [#allocation3], 1
    %213 = vsyncpa %s212, 1
    %214 = vsyncpa [#allocation4], 1
    %s215 = scalar_lea.sflag [#allocation4], 1
    %216 = vsyncpa %s215, 1

</llo_original>
